<compile_context>
chip_gen: v7x
topology: tpu7x:2x2x1
jax: 0.10.0
libtpu: 0.0.40
codegen_flags: <defaults>
</compile_context>

<pallas_src>
import functools

import jax
import jax.numpy as jnp
from jax.experimental import pallas as pl
from jax.experimental.pallas import tpu as pltpu

# ---- config mirroring the PyTorch `args` -------------------------------------------------
P_M = 0.3          # args.p_m
H_PAD = 1          # args.h_pad
W_PAD = 1          # args.w_pad
C_ARG = 2          # args.c
N_FILE = 2         # args.n_file
H_IMG = 16         # args.h
W_IMG = 16         # args.w
C_TOT = C_ARG * N_FILE


# ---------------------------------- Pallas kernel ------------------------------------------

def pixel_masker_kernel(x_ref, u_ref, out_ref, mask_ref, *, p_m, h_pad, w_pad):
    """Fused PixelMasker forward.

    x_ref   : (1, C, H, W)  input image, original dtype
    u_ref   : (C, H, W)     uniform randoms in [0, 1)
    out_ref : (1, C, H, W)  blended output, x.dtype
    mask_ref: (1, C, hm, wm) Bernoulli{0,1} dropout mask (hm = H-2*h_pad, wm = W-2*w_pad)
    """
    _, c, h, w = x_ref.shape
    hm, wm = h - 2 * h_pad, w - 2 * w_pad

    x = x_ref[0].astype(jnp.float32)                     # (C, H, W), f32 compute
    u = u_ref[...]

    # Dropout(ones, p=p_m) * (1-p_m)  ==  Bernoulli(keep = 1-p_m) in {0, 1}
    bern = (u >= p_m).astype(jnp.float32)                # keep with prob 1-p_m

    # padded_mask: interior = bern, border = 1.  (torch F.pad quirk: last dim (W) padded
    # by h_pad, H padded by w_pad -- identical when h_pad == w_pad, asserted in wrapper.)
    row = jax.lax.broadcasted_iota(jnp.int32, (c, h, w), 1)
    col = jax.lax.broadcasted_iota(jnp.int32, (c, h, w), 2)
    interior = ((row >= w_pad) & (row < w_pad + hm)
                & (col >= h_pad) & (col < h_pad + wm))
    pmask = jnp.where(interior, bern, 1.0)

    # separable 3x3 box sum with zero boundary, then subtract the center tap
    zc = jnp.zeros((c, h, 1), jnp.float32)
    hsum = (x
            + jnp.concatenate([zc, x[:, :, :-1]], axis=2)     # left neighbor
            + jnp.concatenate([x[:, :, 1:], zc], axis=2))     # right neighbor
    zr = jnp.zeros((c, 1, w), jnp.float32)
    box = (hsum
           + jnp.concatenate([zr, hsum[:, :-1, :]], axis=1)   # row above
           + jnp.concatenate([hsum[:, 1:, :], zr], axis=1))   # row below
    aver = (box - x) * 0.125                                  # ring-of-8 mean

    out = pmask * x + (1.0 - pmask) * aver
    out_ref[...] = out[None].astype(out_ref.dtype)
    mask_ref[...] = bern[:, w_pad:w_pad + hm, h_pad:h_pad + wm][None]


# ---------------------------------- wrapper -----------------------------------------------

def pixel_masker_forward(x, key, *, p_m=P_M, h_pad=H_PAD, w_pad=W_PAD):
    n, c, h, w = x.shape
    assert n == 1, "PixelMasker's conv2d(permute) construction only works for batch == 1"
    assert h_pad == w_pad, "module requires h_pad == w_pad for padded mask to broadcast"
    hm, wm = h - 2 * h_pad, w - 2 * w_pad

    # Randoms from jax.random (see TODO above re: in-kernel hardware PRNG).
    u = jax.random.uniform(key, (c, h, w), dtype=jnp.float32)

    out, mask = pl.pallas_call(
        functools.partial(pixel_masker_kernel, p_m=p_m, h_pad=h_pad, w_pad=w_pad),
        out_shape=(jax.ShapeDtypeStruct((1, c, h, w), x.dtype),
                   jax.ShapeDtypeStruct((1, c, hm, wm), jnp.float32)),
        in_specs=[pl.BlockSpec(memory_space=pltpu.MemorySpace.VMEM),
                  pl.BlockSpec(memory_space=pltpu.MemorySpace.VMEM)],
        out_specs=(pl.BlockSpec(memory_space=pltpu.MemorySpace.VMEM),
                   pl.BlockSpec(memory_space=pltpu.MemorySpace.VMEM)),
    )(x, u)
    return out, mask


# ---------------------------------- demo / self-check --------------------------------------

if __name__ == "__main__":
    key = jax.random.PRNGKey(0)
    kx, km = jax.random.split(key)
    x = jax.random.normal(kx, (1, C_TOT, H_IMG, W_IMG), dtype=jnp.float32)

    out, mask = pixel_masker_forward(x, km)
    out = jax.block_until_ready(out)
    mask = jax.block_until_ready(mask)

    # pure-JAX reference using the mask produced by the kernel (the PRNG stream differs
    # from torch, so we validate the conv + pad + blend against the same mask)
    x0 = x[0].astype(jnp.float32)
    xp = jnp.pad(x0, ((0, 0), (1, 1), (1, 1)))
    aver_ref = sum(xp[:, dy:dy + H_IMG, dx:dx + W_IMG]
                   for dy in range(3) for dx in range(3)
                   if not (dy == 1 and dx == 1)) / 8.0
    pm_ref = jnp.pad(mask[0], ((0, 0), (W_PAD, W_PAD), (H_PAD, H_PAD)),
                     constant_values=1.0)
    ref = pm_ref * x0 + (1.0 - pm_ref) * aver_ref

    assert out.shape == x.shape
    assert mask.shape == (1, C_TOT, H_IMG - 2 * H_PAD, W_IMG - 2 * W_PAD)
    assert bool(jnp.all((mask == 0.0) | (mask == 1.0)))
    assert bool(jnp.allclose(out[0].astype(jnp.float32), ref, atol=1e-5, rtol=1e-5))

    print("KERNEL_OK")
</pallas_src>

<mosaic_0001>
module attributes {stable_mosaic.version = 11 : i64} {
  func.func @pixel_masker_kernel(%arg0: memref<1x4x16x16xf32, #tpu.memory_space<vmem>>, %arg1: memref<4x16x16xf32, #tpu.memory_space<vmem>>, %arg2: memref<1x4x16x16xf32, #tpu.memory_space<vmem>>, %arg3: memref<1x4x14x14xf32, #tpu.memory_space<vmem>>) attributes {dimension_semantics = [], scalar_prefetch = 0 : i64, scratch_operands = 0 : i64, tpu.core_type = #tpu.core_type<tc>} {
    %c0 = arith.constant 0 : index
    %c0_0 = arith.constant 0 : index
    %c0_1 = arith.constant 0 : index
    %c0_2 = arith.constant 0 : index
    %0 = vector.load %arg0[%c0, %c0_0, %c0_1, %c0_2] : memref<1x4x16x16xf32, #tpu.memory_space<vmem>>, vector<1x4x16x16xf32>
    %1 = vector.shape_cast %0 : vector<1x4x16x16xf32> to vector<4x16x16xf32>
    %c0_3 = arith.constant 0 : index
    %c0_4 = arith.constant 0 : index
    %c0_5 = arith.constant 0 : index
    %2 = vector.load %arg1[%c0_3, %c0_4, %c0_5] : memref<4x16x16xf32, #tpu.memory_space<vmem>>, vector<4x16x16xf32>
    %cst = arith.constant 3.000000e-01 : f32
    %3 = vector.broadcast %cst : f32 to vector<4x16x16xf32>
    %4 = arith.cmpf oge, %2, %3 : vector<4x16x16xf32>
    %5 = arith.extui %4 : vector<4x16x16xi1> to vector<4x16x16xi32>
    %6 = arith.sitofp %5 : vector<4x16x16xi32> to vector<4x16x16xf32>
    %7 = tpu.iota {dimensions = array<i32: 1>} : vector<4x16x16xi32>
    %8 = tpu.iota {dimensions = array<i32: 2>} : vector<4x16x16xi32>
    %c1_i32 = arith.constant 1 : i32
    %9 = vector.broadcast %c1_i32 : i32 to vector<4x16x16xi32>
    %10 = arith.cmpi sge, %7, %9 : vector<4x16x16xi32>
    %c15_i32 = arith.constant 15 : i32
    %11 = vector.broadcast %c15_i32 : i32 to vector<4x16x16xi32>
    %12 = arith.cmpi slt, %7, %11 : vector<4x16x16xi32>
    %13 = arith.andi %10, %12 : vector<4x16x16xi1>
    %c1_i32_6 = arith.constant 1 : i32
    %14 = vector.broadcast %c1_i32_6 : i32 to vector<4x16x16xi32>
    %15 = arith.cmpi sge, %8, %14 : vector<4x16x16xi32>
    %16 = arith.andi %13, %15 : vector<4x16x16xi1>
    %c15_i32_7 = arith.constant 15 : i32
    %17 = vector.broadcast %c15_i32_7 : i32 to vector<4x16x16xi32>
    %18 = arith.cmpi slt, %8, %17 : vector<4x16x16xi32>
    %19 = arith.andi %16, %18 : vector<4x16x16xi1>
    %cst_8 = arith.constant 1.000000e+00 : f32
    %20 = vector.broadcast %cst_8 : f32 to vector<4x16x16xf32>
    %21 = arith.select %19, %6, %20 : vector<4x16x16xi1>, vector<4x16x16xf32>
    %cst_9 = arith.constant 0.000000e+00 : f32
    %22 = vector.broadcast %cst_9 : f32 to vector<4x16x1xf32>
    %23 = vector.extract_strided_slice %1 {offsets = [0, 0, 0], sizes = [4, 16, 15], strides = [1, 1, 1]} : vector<4x16x16xf32> to vector<4x16x15xf32>
    %24 = tpu.concatenate %22, %23 in 2 : vector<4x16x1xf32>, vector<4x16x15xf32> -> vector<4x16x16xf32>
    %25 = arith.addf %1, %24 : vector<4x16x16xf32>
    %26 = vector.extract_strided_slice %1 {offsets = [0, 0, 1], sizes = [4, 16, 15], strides = [1, 1, 1]} : vector<4x16x16xf32> to vector<4x16x15xf32>
    %27 = tpu.concatenate %26, %22 in 2 : vector<4x16x15xf32>, vector<4x16x1xf32> -> vector<4x16x16xf32>
    %28 = arith.addf %25, %27 : vector<4x16x16xf32>
    %cst_10 = arith.constant 0.000000e+00 : f32
    %29 = vector.broadcast %cst_10 : f32 to vector<4x1x16xf32>
    %30 = vector.extract_strided_slice %28 {offsets = [0, 0, 0], sizes = [4, 15, 16], strides = [1, 1, 1]} : vector<4x16x16xf32> to vector<4x15x16xf32>
    %31 = tpu.concatenate %29, %30 in 1 : vector<4x1x16xf32>, vector<4x15x16xf32> -> vector<4x16x16xf32>
    %32 = arith.addf %28, %31 : vector<4x16x16xf32>
    %33 = vector.extract_strided_slice %28 {offsets = [0, 1, 0], sizes = [4, 15, 16], strides = [1, 1, 1]} : vector<4x16x16xf32> to vector<4x15x16xf32>
    %34 = tpu.concatenate %33, %29 in 1 : vector<4x15x16xf32>, vector<4x1x16xf32> -> vector<4x16x16xf32>
    %35 = arith.addf %32, %34 : vector<4x16x16xf32>
    %36 = arith.subf %35, %1 : vector<4x16x16xf32>
    %cst_11 = arith.constant 1.250000e-01 : f32
    %37 = vector.broadcast %cst_11 : f32 to vector<4x16x16xf32>
    %38 = arith.mulf %36, %37 : vector<4x16x16xf32>
    %39 = arith.mulf %21, %1 : vector<4x16x16xf32>
    %cst_12 = arith.constant 1.000000e+00 : f32
    %40 = vector.broadcast %cst_12 : f32 to vector<4x16x16xf32>
    %41 = arith.subf %40, %21 : vector<4x16x16xf32>
    %42 = arith.mulf %41, %38 : vector<4x16x16xf32>
    %43 = arith.addf %39, %42 : vector<4x16x16xf32>
    %44 = vector.shape_cast %43 : vector<4x16x16xf32> to vector<1x4x16x16xf32>
    %c0_13 = arith.constant 0 : index
    %c0_14 = arith.constant 0 : index
    %c0_15 = arith.constant 0 : index
    %c0_16 = arith.constant 0 : index
    %45 = vector.load %arg2[%c0_13, %c0_14, %c0_15, %c0_16] : memref<1x4x16x16xf32, #tpu.memory_space<vmem>>, vector<1x4x16x16xf32>
    tpu.vector_store %arg2[%c0_13, %c0_14, %c0_15, %c0_16], %44 {strides = array<i32>} : memref<1x4x16x16xf32, #tpu.memory_space<vmem>>, vector<1x4x16x16xf32>,
    %46 = vector.extract_strided_slice %6 {offsets = [0, 1, 1], sizes = [4, 14, 14], strides = [1, 1, 1]} : vector<4x16x16xf32> to vector<4x14x14xf32>
    %47 = vector.shape_cast %46 : vector<4x14x14xf32> to vector<1x4x14x14xf32>
    %c0_17 = arith.constant 0 : index
    %c0_18 = arith.constant 0 : index
    %c0_19 = arith.constant 0 : index
    %c0_20 = arith.constant 0 : index
    %48 = vector.load %arg3[%c0_17, %c0_18, %c0_19, %c0_20] : memref<1x4x14x14xf32, #tpu.memory_space<vmem>>, vector<1x4x14x14xf32>
    tpu.vector_store %arg3[%c0_17, %c0_18, %c0_19, %c0_20], %47 {strides = array<i32>} : memref<1x4x14x14xf32, #tpu.memory_space<vmem>>, vector<1x4x14x14xf32>,
    return
  }
}

</mosaic_0001>

<llo_original>
// kernel: tpu_custom_call.1
$region0: #{tpu_custom_call.1}
  #allocation0 [shape = 'u32[]', space=smem, size = 0x4, offset = 0x4, fixed_abs, tag = 'smem constant byte address 0x4 - core index']
  #allocation1 [shape = 'u32[144,128]{1,0:T(1,128)}', space=vmem, size = 0x12000, scoped, tag = 'internal scratch']
  %s0 = inlined_call_operand.hbm [shape: f32[1,4,16,16], index: 0, kind: input, shape index: {}]
  %s1 = inlined_call_operand.hbm [shape: f32[4,16,16], index: 1, kind: input, shape index: {}]
  %s2 = inlined_call_operand.hbm [shape: f32[1,4,16,16], index: 2, kind: output, shape index: {0}]
  %s3 = inlined_call_operand.vmem [shape: f32[1,4,14,14], index: 3, kind: output, shape index: {1}]
  %4 = xla_tuple %s2, %s3
  %s5 = sld [smem:[#allocation0]]
  $region34: #{tpu_custom_call.1} parent=0
    _
  %s7 = ssub.s32 1, %s5
  %s8 = scalar_select 0, %s7, %s5
  $region1: #{tpu_custom_call.1} parent=0
    #allocation2 [shape = 'u8[32768]{0}', space=vmem, size = 0x8000, scoped, tag = 'input window, operand 0, single buffered']
    #allocation3 [shape = 's32[1]{0}', space=sflag, size = 0x4, scoped, tag = 'scoped memory for tpu_custom_call.1']
    #allocation4 [shape = 's32[1]{0}', space=sflag, size = 0x4, scoped, tag = 'scoped memory for tpu_custom_call.1']
    #allocation5 [shape = 'u8[32768]{0}', space=vmem, size = 0x8000, scoped, tag = 'input window, operand 1, single buffered']
    #allocation6 [shape = 's32[1]{0}', space=sflag, size = 0x4, scoped, tag = 'scoped memory for tpu_custom_call.1']
    #allocation7 [shape = 'u8[32768]{0}', space=vmem, size = 0x8000, scoped, tag = 'output window, operand 0, single buffered']
    %9 = vsyncpa [#allocation3], 0
    %10 = vsyncpa [#allocation6], 0
    %11 = vsyncpa [#allocation4], 0
    // Predicated region
    $region2: #{tpu_custom_call.1} parent=1 // pred_check
      _
    $region3: #{tpu_custom_call.1} parent=1 // pred_check_branch
      %13 = sbr.rel (0) target = $region5
    $region4: #{tpu_custom_call.1} parent=1 // pred_region
      %s15 = ssub.s32 1024, 1024
      %16 = vsyncadd [#allocation3], %s15
      %s17 = sshll.u32 [#allocation2], 4
      %s18 = int_to_ptr.vmem [resolvable:$true] %s17
      %23 = dma.hbm_to_vmem [thread:$0]  %s0, 1024, %s18, [#allocation3], 128, 128, 8
    $region5: #{tpu_custom_call.1} parent=1 // pred_fallthru
      _
    // Predicated region
    $region6: #{tpu_custom_call.1} parent=1 // pred_check
      _
    $region7: #{tpu_custom_call.1} parent=1 // pred_check_branch
      %25 = sbr.rel (0) target = $region9
    $region8: #{tpu_custom_call.1} parent=1 // pred_region
      %s27 = ssub.s32 1024, 1024
      %28 = vsyncadd [#allocation6], %s27
      %s29 = sshll.u32 [#allocation5], 4
      %s30 = int_to_ptr.vmem [resolvable:$true] %s29
      %35 = dma.hbm_to_vmem [thread:$0]  %s1, 1024, %s30, [#allocation6], 128, 128, 8
    $region9: #{tpu_custom_call.1} parent=1 // pred_fallthru
      _
    // Predicated region
    $region10: #{tpu_custom_call.1} parent=1 // pred_check
      _
    $region11: #{tpu_custom_call.1} parent=1 // pred_check_branch
      %37 = sbr.rel (0) target = $region13
    $region12: #{tpu_custom_call.1} parent=1 // pred_region
      %38 = dma.done [#allocation3], 1024
    $region13: #{tpu_custom_call.1} parent=1 // pred_fallthru
      _
    // Predicated region
    $region14: #{tpu_custom_call.1} parent=1 // pred_check
      _
    $region15: #{tpu_custom_call.1} parent=1 // pred_check_branch
      %40 = sbr.rel (0) target = $region17
    $region16: #{tpu_custom_call.1} parent=1 // pred_region
      %41 = dma.done [#allocation6], 1024
    $region17: #{tpu_custom_call.1} parent=1 // pred_fallthru
      _
    %v42 = vld [vmem:[#allocation2] sm:$0xff]
    %v43 = vld [vmem:[#allocation2 + $0x8] sm:$0xff]
    %v44 = vld [vmem:[#allocation2 + $0x10] sm:$0xff]
    %v45 = vld [vmem:[#allocation2 + $0x18] sm:$0xff]
    %v46 = vld [vmem:[#allocation2 + $0x20] sm:$0xff]
    %v47 = vld [vmem:[#allocation2 + $0x28] sm:$0xff]
    %v48 = vld [vmem:[#allocation2 + $0x30] sm:$0xff]
    %v49 = vld [vmem:[#allocation2 + $0x38] sm:$0xff]
    %v50 = vld [vmem:[#allocation5] sm:$0xff]
    %v51 = vld [vmem:[#allocation5 + $0x8] sm:$0xff]
    %v52 = vld [vmem:[#allocation5 + $0x10] sm:$0xff]
    %v53 = vld [vmem:[#allocation5 + $0x18] sm:$0xff]
    %v54 = vld [vmem:[#allocation5 + $0x20] sm:$0xff]
    %v55 = vld [vmem:[#allocation5 + $0x28] sm:$0xff]
    %v56 = vld [vmem:[#allocation5 + $0x30] sm:$0xff]
    %v57 = vld [vmem:[#allocation5 + $0x38] sm:$0xff]
    %vm58 = vcmp.ge.f32.partialorder %v50, 0.3
    %vm59 = vcmp.ge.f32.partialorder %v51, 0.3
    %vm60 = vcmp.ge.f32.partialorder %v52, 0.3
    %vm61 = vcmp.ge.f32.partialorder %v53, 0.3
    %vm62 = vcmp.ge.f32.partialorder %v54, 0.3
    %vm63 = vcmp.ge.f32.partialorder %v55, 0.3
    %vm64 = vcmp.ge.f32.partialorder %v56, 0.3
    %vm65 = vcmp.ge.f32.partialorder %v57, 0.3
    %v66 = vsel %vm58, 1, 0
    %v67 = vsel %vm59, 1, 0
    %v68 = vsel %vm60, 1, 0
    %v69 = vsel %vm61, 1, 0
    %v70 = vsel %vm62, 1, 0
    %v71 = vsel %vm63, 1, 0
    %v72 = vsel %vm64, 1, 0
    %v73 = vsel %vm65, 1, 0
    %v74 = vcvt.s32.f32 %v66
    %v75 = vcvt.s32.f32 %v67
    %v76 = vcvt.s32.f32 %v68
    %v77 = vcvt.s32.f32 %v69
    %v78 = vcvt.s32.f32 %v70
    %v79 = vcvt.s32.f32 %v71
    %v80 = vcvt.s32.f32 %v72
    %v81 = vcvt.s32.f32 %v73
    %v82 = vlaneseq
    %v83 = vshrl.u32 %v82, 7
    %v84 = vadd.s32 %v83, 8
    %v85 = vlaneseq
    %v86 = vand.u32 %v85, 127
    %vm87 = vcmp.ge.s32.totalorder %v83, 1
    %vm88 = vcmp.ge.s32.totalorder %v84, 1
    %vm89 = vcmp.lt.s32.totalorder %v83, 15
    %vm90 = vcmp.lt.s32.totalorder %v84, 15
    %vm91 = vmand %vm87, %vm89
    %vm92 = vmand %vm88, %vm90
    %vm93 = vcmp.ge.s32.totalorder %v86, 1
    %vm94 = vmand %vm91, %vm93
    %vm95 = vmand %vm92, %vm93
    %vm96 = vcmp.lt.s32.totalorder %v86, 15
    %vm97 = vmand %vm94, %vm96
    %vm98 = vmand %vm95, %vm96
    %v99 = vsel %vm97, %v74, 1.0
    %v100 = vsel %vm98, %v75, 1.0
    %v101 = vsel %vm97, %v76, 1.0
    %v102 = vsel %vm98, %v77, 1.0
    %v103 = vsel %vm97, %v78, 1.0
    %v104 = vsel %vm98, %v79, 1.0
    %v105 = vsel %vm97, %v80, 1.0
    %v106 = vsel %vm98, %v81, 1.0
    %115 = vrot.lane.b32.xlu0 %v42, 1
    %v116 = vpop.permute.xlu0 %115
    %117 = vrot.lane.b32.xlu0 %v43, 1
    %v118 = vpop.permute.xlu0 %117
    %119 = vrot.lane.b32.xlu0 %v44, 1
    %v120 = vpop.permute.xlu0 %119
    %121 = vrot.lane.b32.xlu0 %v45, 1
    %v122 = vpop.permute.xlu0 %121
    %123 = vrot.lane.b32.xlu0 %v46, 1
    %v124 = vpop.permute.xlu0 %123
    %125 = vrot.lane.b32.xlu0 %v47, 1
    %v126 = vpop.permute.xlu0 %125
    %127 = vrot.lane.b32.xlu0 %v48, 1
    %v128 = vpop.permute.xlu0 %127
    %129 = vrot.lane.b32.xlu0 %v49, 1
    %v130 = vpop.permute.xlu0 %129
    %vm139 = vcmask 7168
    %v140 = vsel %vm139, 0.0, %v116
    %v141 = vsel %vm139, 0.0, %v118
    %v142 = vsel %vm139, 0.0, %v120
    %v143 = vsel %vm139, 0.0, %v122
    %v144 = vsel %vm139, 0.0, %v124
    %v145 = vsel %vm139, 0.0, %v126
    %v146 = vsel %vm139, 0.0, %v128
    %v147 = vsel %vm139, 0.0, %v130
    %v148 = vadd.f32 %v42, %v140
    %v149 = vadd.f32 %v43, %v141
    %v150 = vadd.f32 %v44, %v142
    %v151 = vadd.f32 %v45, %v143
    %v152 = vadd.f32 %v46, %v144
    %v153 = vadd.f32 %v47, %v145
    %v154 = vadd.f32 %v48, %v146
    %v155 = vadd.f32 %v49, %v147
    %156 = vrot.lane.b32.xlu0 %v42, 127
    %v157 = vpop.permute.xlu0 %156
    %158 = vrot.lane.b32.xlu0 %v43, 127
    %v159 = vpop.permute.xlu0 %158
    %160 = vrot.lane.b32.xlu0 %v44, 127
    %v161 = vpop.permute.xlu0 %160
    %162 = vrot.lane.b32.xlu0 %v45, 127
    %v163 = vpop.permute.xlu0 %162
    %164 = vrot.lane.b32.xlu0 %v46, 127
    %v165 = vpop.permute.xlu0 %164
    %166 = vrot.lane.b32.xlu0 %v47, 127
    %v167 = vpop.permute.xlu0 %166
    %168 = vrot.lane.b32.xlu0 %v48, 127
    %v169 = vpop.permute.xlu0 %168
    %170 = vrot.lane.b32.xlu0 %v49, 127
    %v171 = vpop.permute.xlu0 %170
    %vm180 = vcmask 121856
    %v181 = vsel %vm180, %v157, 0.0
    %v182 = vsel %vm180, %v159, 0.0
    %v183 = vsel %vm180, %v161, 0.0
    %v184 = vsel %vm180, %v163, 0.0
    %v185 = vsel %vm180, %v165, 0.0
    %v186 = vsel %vm180, %v167, 0.0
    %v187 = vsel %vm180, %v169, 0.0
    %v188 = vsel %vm180, %v171, 0.0
    %v189 = vadd.f32 %v148, %v181
    %v190 = vadd.f32 %v149, %v182
    %v191 = vadd.f32 %v150, %v183
    %v192 = vadd.f32 %v151, %v184
    %v193 = vadd.f32 %v152, %v185
    %v194 = vadd.f32 %v153, %v186
    %v195 = vadd.f32 %v154, %v187
    %v196 = vadd.f32 %v155, %v188
    %vm205 = vcmask 1040384
    %v206 = vrot.slane %v189, 7
    %v207 = vrot.slane %v190, 7
    %v208 = vsel %vm205, %v206, %v207
    %v209 = vrot.slane %v191, 7
    %v210 = vrot.slane %v192, 7
    %v211 = vsel %vm205, %v209, %v210
    %v212 = vrot.slane %v193, 7
    %v213 = vrot.slane %v194, 7
    %v214 = vsel %vm205, %v212, %v213
    %v215 = vrot.slane %v195, 7
    %v216 = vrot.slane %v196, 7
    %v217 = vsel %vm205, %v215, %v216
    %v226 = vsel %vm205, 0.0, %v206
    %v227 = vsel %vm205, 0.0, %v209
    %v228 = vsel %vm205, 0.0, %v212
    %v229 = vsel %vm205, 0.0, %v215
    %v230 = vadd.f32 %v189, %v226
    %v231 = vadd.f32 %v190, %v208
    %v232 = vadd.f32 %v191, %v227
    %v233 = vadd.f32 %v192, %v211
    %v234 = vadd.f32 %v193, %v228
    %v235 = vadd.f32 %v194, %v214
    %v236 = vadd.f32 %v195, %v229
    %v237 = vadd.f32 %v196, %v217
    %vm238 = vcmask 1046528
    %v239 = vrot.slane %v189, 1
    %v240 = vrot.slane %v190, 1
    %v241 = vsel %vm238, %v239, %v240
    %v242 = vrot.slane %v191, 1
    %v243 = vrot.slane %v192, 1
    %v244 = vsel %vm238, %v242, %v243
    %v245 = vrot.slane %v193, 1
    %v246 = vrot.slane %v194, 1
    %v247 = vsel %vm238, %v245, %v246
    %v248 = vrot.slane %v195, 1
    %v249 = vrot.slane %v196, 1
    %v250 = vsel %vm238, %v248, %v249
    %v259 = vsel %vm238, %v240, 0.0
    %v260 = vsel %vm238, %v243, 0.0
    %v261 = vsel %vm238, %v246, 0.0
    %v262 = vsel %vm238, %v249, 0.0
    %v263 = vadd.f32 %v230, %v241
    %v264 = vadd.f32 %v231, %v259
    %v265 = vadd.f32 %v232, %v244
    %v266 = vadd.f32 %v233, %v260
    %v267 = vadd.f32 %v234, %v247
    %v268 = vadd.f32 %v235, %v261
    %v269 = vadd.f32 %v236, %v250
    %v270 = vadd.f32 %v237, %v262
    %v271 = vsub.f32 %v263, %v42
    %v272 = vsub.f32 %v264, %v43
    %v273 = vsub.f32 %v265, %v44
    %v274 = vsub.f32 %v266, %v45
    %v275 = vsub.f32 %v267, %v46
    %v276 = vsub.f32 %v268, %v47
    %v277 = vsub.f32 %v269, %v48
    %v278 = vsub.f32 %v270, %v49
    %v279 = vmul.f32 %v271, 0.125
    %v280 = vmul.f32 %v272, 0.125
    %v281 = vmul.f32 %v273, 0.125
    %v282 = vmul.f32 %v274, 0.125
    %v283 = vmul.f32 %v275, 0.125
    %v284 = vmul.f32 %v276, 0.125
    %v285 = vmul.f32 %v277, 0.125
    %v286 = vmul.f32 %v278, 0.125
    %v287 = vmul.f32 %v99, %v42
    %v288 = vmul.f32 %v100, %v43
    %v289 = vmul.f32 %v101, %v44
    %v290 = vmul.f32 %v102, %v45
    %v291 = vmul.f32 %v103, %v46
    %v292 = vmul.f32 %v104, %v47
    %v293 = vmul.f32 %v105, %v48
    %v294 = vmul.f32 %v106, %v49
    %v295 = vsub.f32 1.0, %v99
    %v296 = vsub.f32 1.0, %v100
    %v297 = vsub.f32 1.0, %v101
    %v298 = vsub.f32 1.0, %v102
    %v299 = vsub.f32 1.0, %v103
    %v300 = vsub.f32 1.0, %v104
    %v301 = vsub.f32 1.0, %v105
    %v302 = vsub.f32 1.0, %v106
    %v303 = vmul.f32 %v295, %v279
    %v304 = vmul.f32 %v296, %v280
    %v305 = vmul.f32 %v297, %v281
    %v306 = vmul.f32 %v298, %v282
    %v307 = vmul.f32 %v299, %v283
    %v308 = vmul.f32 %v300, %v284
    %v309 = vmul.f32 %v301, %v285
    %v310 = vmul.f32 %v302, %v286
    %v311 = vadd.f32 %v287, %v303
    %v312 = vadd.f32 %v288, %v304
    %v313 = vadd.f32 %v289, %v305
    %v314 = vadd.f32 %v290, %v306
    %v315 = vadd.f32 %v291, %v307
    %v316 = vadd.f32 %v292, %v308
    %v317 = vadd.f32 %v293, %v309
    %v318 = vadd.f32 %v294, %v310
    %vm319 = vcmask 130048
    %320 = vst.msk [vmem:[#allocation7] sm:$0xff] %vm319, %v311
    %321 = vst.msk [vmem:[#allocation7 + $0x8] sm:$0xff] %vm319, %v312
    %322 = vst.msk [vmem:[#allocation7 + $0x10] sm:$0xff] %vm319, %v313
    %323 = vst.msk [vmem:[#allocation7 + $0x18] sm:$0xff] %vm319, %v314
    %324 = vst.msk [vmem:[#allocation7 + $0x20] sm:$0xff] %vm319, %v315
    %325 = vst.msk [vmem:[#allocation7 + $0x28] sm:$0xff] %vm319, %v316
    %326 = vst.msk [vmem:[#allocation7 + $0x30] sm:$0xff] %vm319, %v317
    %327 = vst.msk [vmem:[#allocation7 + $0x38] sm:$0xff] %vm319, %v318
    %336 = vrot.lane.b32.xlu0 %v74, 127
    %v337 = vpop.permute.xlu0 %336
    %338 = vrot.lane.b32.xlu0 %v75, 127
    %v339 = vpop.permute.xlu0 %338
    %340 = vrot.lane.b32.xlu0 %v76, 127
    %v341 = vpop.permute.xlu0 %340
    %342 = vrot.lane.b32.xlu0 %v77, 127
    %v343 = vpop.permute.xlu0 %342
    %344 = vrot.lane.b32.xlu0 %v78, 127
    %v345 = vpop.permute.xlu0 %344
    %346 = vrot.lane.b32.xlu0 %v79, 127
    %v347 = vpop.permute.xlu0 %346
    %348 = vrot.lane.b32.xlu0 %v80, 127
    %v349 = vpop.permute.xlu0 %348
    %350 = vrot.lane.b32.xlu0 %v81, 127
    %v351 = vpop.permute.xlu0 %350
    %vm360 = vcmask 113665
    %361 = vst.msk [vmem:[%s3 - $0x1] sm:$0xfe] %vm360, %v337
    %vm362 = vcmask 112640
    %363 = vst.msk [vmem:[%s3 + $0x7] sm:$0x7f] %vm362, %v339
    %364 = vst.msk [vmem:[%s3 + $0xf] sm:$0xfe] %vm360, %v341
    %365 = vst.msk [vmem:[%s3 + $0x17] sm:$0x7f] %vm362, %v343
    %366 = vst.msk [vmem:[%s3 + $0x1f] sm:$0xfe] %vm360, %v345
    %367 = vst.msk [vmem:[%s3 + $0x27] sm:$0x7f] %vm362, %v347
    %368 = vst.msk [vmem:[%s3 + $0x2f] sm:$0xfe] %vm360, %v349
    %369 = vst.msk [vmem:[%s3 + $0x37] sm:$0x7f] %vm362, %v351
    // Predicated region
    $region18: #{tpu_custom_call.1} parent=1 // pred_check
      _
    $region19: #{tpu_custom_call.1} parent=1 // pred_check_branch
      %371 = sbr.rel (0) target = $region21
    $region20: #{tpu_custom_call.1} parent=1 // pred_region
      %s373 = ssub.s32 1024, 1024
      %374 = vsyncadd [#allocation4], %s373
      %s375 = sshll.u32 [#allocation7], 4
      %s376 = int_to_ptr.vmem [resolvable:$true] %s375
      %381 = dma.vmem_to_hbm [thread:$0]  %s376, 1024, %s2, [#allocation4], 128, 128, 8
    $region21: #{tpu_custom_call.1} parent=1 // pred_fallthru
      _
    // Predicated region
    $region22: #{tpu_custom_call.1} parent=1 // pred_check
      _
    $region23: #{tpu_custom_call.1} parent=1 // pred_check_branch
      %383 = sbr.rel (0) target = $region25
    $region24: #{tpu_custom_call.1} parent=1 // pred_region
      _
    $region25: #{tpu_custom_call.1} parent=1 // pred_fallthru
      _
    // Predicated region
    $region26: #{tpu_custom_call.1} parent=1 // pred_check
      _
    $region27: #{tpu_custom_call.1} parent=1 // pred_check_branch
      %385 = sbr.rel (0) target = $region29
    $region28: #{tpu_custom_call.1} parent=1 // pred_region
      %386 = dma.done [#allocation4], 1024
    $region29: #{tpu_custom_call.1} parent=1 // pred_fallthru
      _
    // Predicated region
    $region30: #{tpu_custom_call.1} parent=1 // pred_check
      _
    $region31: #{tpu_custom_call.1} parent=1 // pred_check_branch
      %388 = sbr.rel (0) target = $region33
    $region32: #{tpu_custom_call.1} parent=1 // pred_region
      _
    $region33: #{tpu_custom_call.1} parent=1 // pred_fallthru
      _
    %389 = vsyncpa [#allocation3], 1
    %390 = vsyncpa [#allocation6], 1
    %391 = vsyncpa [#allocation4], 1

</llo_original>
